<compile_context>
chip_gen: v7x
topology: tpu7x:2x2x1
jax: 0.10.0
libtpu: 0.0.40
codegen_flags: <defaults>
</compile_context>

<pallas_src>
import functools

import jax
import jax.numpy as jnp
from jax.experimental import pallas as pl
from jax.experimental.pallas import tpu as pltpu


def _round_up(x, m):
    return (x + m - 1) // m * m


_STEP_OVERHEAD_ROWS = 48  # ~0.35 us per grid step expressed in token-rows of HBM traffic


def _choose_token_tile(n_tokens, batch):
    """Pick TM (multiple of 16, <= 512) minimizing padded rows + per-step overhead,
    then shrink so the (token-tile, batch) grid has >= 4 points for v7x's 2 TCs."""
    best_tm, best_score = 16, None
    for tm in range(16, 513, 16):
        n_pad = _round_up(n_tokens, tm)
        score = n_pad + _STEP_OVERHEAD_ROWS * (n_pad // tm)
        if best_score is None or score < best_score or (score == best_score and tm > best_tm):
            best_tm, best_score = tm, score
    tm = best_tm
    # v7x has 2 TensorCores; a 1-2 point grid leaves one idle. Neutral on v5e/v6e.
    while tm > 16 and batch * (-(-n_tokens // tm)) < 4:
        tm = max(16, _round_up(tm // 2, 16))
    return tm


def _proj_kernel(tokens_ref, w_ref, pos_ref, out_ref):
    # tokens_ref: (1, TM, K_pad) bf16  -- one token-tile of one batch element
    #             (row 0 of the first tile is all-zero -> yields the cls token)
    # w_ref:      (K_pad, emb)   bf16  -- projection weight, constant across the grid
    # pos_ref:    (TM, emb)      f32   -- row0: cls+pos[0]; rows 1..: pos[t]+conv_b; pad: 0
    # out_ref:    (1, TM, emb)   f32
    acc = jnp.dot(tokens_ref[0], w_ref[...], preferred_element_type=jnp.float32)
    out_ref[0] = (acc + pos_ref[...]).astype(out_ref.dtype)


@functools.partial(jax.jit, static_argnums=(5,))
def embedding_forward(x, conv_w, conv_b, cls_token, positions, patch_size):
    """x: (b, c, H, W) NCHW float32. Returns (b, (H//p)*(W//p) + 1, emb)."""
    b, c, H, W = x.shape
    p = patch_size
    hp, wp = H // p, W // p
    n_patches = hp * wp
    n_tokens = n_patches + 1
    emb = conv_w.shape[0]
    K = c * p * p

    TM = _choose_token_tile(n_tokens, b)
    n_pad = _round_up(n_tokens, TM)
    K_pad = _round_up(K, 128)
    n_tiles = n_pad // TM

    # --- glue: patchify in (c, ph, pw) order matching Conv2d weight layout (E, C, p, p),
    # prepend ONE all-zero token row (cls row: 0 @ W == 0, cls value rides in on pos row 0),
    # pad token/K axes, cast bf16. allow_input_fusion lets XLA fuse this chain into the
    # pallas_call operand instead of materializing it in HBM.
    patches = x.reshape(b, c, hp, p, wp, p)
    patches = patches.transpose(0, 2, 4, 1, 3, 5).reshape(b, n_patches, K)
    tokens = jnp.pad(patches, ((0, 0), (1, n_pad - n_tokens), (0, K_pad - K)))
    tokens = tokens.astype(jnp.bfloat16)

    w_mat = conv_w.reshape(emb, K).T                                   # (K, emb)
    w_mat = jnp.pad(w_mat, ((0, K_pad - K), (0, 0))).astype(jnp.bfloat16)

    # Per-token additive rows (all f32):
    #   row 0              -> cls_token + positions[0]   (NO conv bias on the cls row)
    #   rows 1..n_tokens-1 -> positions[1:] + conv_b
    #   rows beyond        -> 0 (token-axis padding, sliced off below)
    pos_rows = jnp.concatenate(
        [cls_token.reshape(1, emb).astype(jnp.float32) + positions[:1].astype(jnp.float32),
         positions[1:].astype(jnp.float32) + conv_b.astype(jnp.float32)[None, :]],
        axis=0)
    pos_rows = jnp.pad(pos_rows, ((0, n_pad - n_tokens), (0, 0)))

    out = pl.pallas_call(
        _proj_kernel,
        out_shape=jax.ShapeDtypeStruct((b, n_pad, emb), jnp.float32),
        grid_spec=pltpu.PrefetchScalarGridSpec(
            num_scalar_prefetch=0,
            # Token tile OUTER, batch INNER: pos_rows' block index only changes on the
            # outer axis, so it is DMA'd once per tile and reused across the batch.
            grid=(n_tiles, b),
            in_specs=[
                pl.BlockSpec((1, TM, K_pad), lambda t, bi: (bi, t, 0)),
                pl.BlockSpec((K_pad, emb), lambda t, bi: (0, 0)),
                pl.BlockSpec((TM, emb), lambda t, bi: (t, 0)),
            ],
            out_specs=pl.BlockSpec((1, TM, emb), lambda t, bi: (bi, t, 0)),
        ),
        compiler_params=pltpu.CompilerParams(
            dimension_semantics=("parallel", "parallel"),
            allow_input_fusion=[True, False, False],
        ),
    )(tokens, w_mat, pos_rows)

    # Only token-axis padding remains (cls row already in place); drop it.
    return out[:, :n_tokens, :].astype(x.dtype)


# ----------------------------- references for testing -----------------------------

def _patchify(x, patch_size):
    b, c, H, W = x.shape
    p = patch_size
    hp, wp = H // p, W // p
    return x.reshape(b, c, hp, p, wp, p).transpose(0, 2, 4, 1, 3, 5).reshape(
        b, hp * wp, c * p * p)


def _reference_f32(x, conv_w, conv_b, cls_token, positions, patch_size):
    # Pure-f32 PyTorch-equivalent math.
    b = x.shape[0]
    emb = conv_w.shape[0]
    patches = _patchify(x, patch_size)
    proj = jnp.einsum("bnk,ek->bne", patches, conv_w.reshape(emb, -1)) + conv_b
    cls = jnp.broadcast_to(cls_token.reshape(1, 1, emb), (b, 1, emb))
    return jnp.concatenate([cls, proj], axis=1) + positions


def _reference_bf16(x, conv_w, conv_b, cls_token, positions, patch_size):
    # Same numeric design as the kernel path: bf16 operands, f32 accumulation.
    b = x.shape[0]
    emb = conv_w.shape[0]
    patches = _patchify(x, patch_size).astype(jnp.bfloat16)
    w = conv_w.reshape(emb, -1).T.astype(jnp.bfloat16)
    proj = jnp.einsum("bnk,ke->bne", patches, w,
                      preferred_element_type=jnp.float32) + conv_b
    cls = jnp.broadcast_to(cls_token.reshape(1, 1, emb), (b, 1, emb))
    return (jnp.concatenate([cls, proj], axis=1) + positions).astype(x.dtype)


if __name__ == "__main__":
    # Small, consistent shapes: in_channels=3, patch_size=4, emb_size=128, img_size=16
    in_channels, patch_size, emb_size, img_size = 3, 4, 128, 16
    batch = 2
    n_patches = (img_size // patch_size) ** 2
    n_tokens = n_patches + 1

    key = jax.random.PRNGKey(0)
    kx, kw, kb, kc, kp = jax.random.split(key, 5)
    x = jax.random.normal(kx, (batch, in_channels, img_size, img_size), jnp.float32)
    conv_w = jax.random.normal(
        kw, (emb_size, in_channels, patch_size, patch_size), jnp.float32) * 0.02
    conv_b = jax.random.normal(kb, (emb_size,), jnp.float32) * 0.02
    cls_token = jax.random.normal(kc, (1, 1, emb_size), jnp.float32)
    positions = jax.random.normal(kp, (n_tokens, emb_size), jnp.float32)

    out = embedding_forward(x, conv_w, conv_b, cls_token, positions, patch_size)
    out = jax.block_until_ready(out)

    assert out.shape == (batch, n_tokens, emb_size), out.shape
    # Tight check vs an identically-quantized (bf16-operand, f32-accum) reference.
    ref_bf16 = _reference_bf16(x, conv_w, conv_b, cls_token, positions, patch_size)
    assert jnp.allclose(out, ref_bf16, atol=1e-4, rtol=1e-4), "mismatch vs bf16 reference"
    # Loose semantic check vs the pure-f32 module math (bf16 input quantization only).
    ref_f32 = _reference_f32(x, conv_w, conv_b, cls_token, positions, patch_size)
    assert jnp.allclose(out, ref_f32, atol=3e-2, rtol=3e-2), "mismatch vs f32 reference"
    print("KERNEL_OK")
</pallas_src>

<mosaic_0001>
module attributes {stable_mosaic.version = 11 : i64} {
  func.func @_proj_kernel(%arg0: i32, %arg1: i32, %arg2: memref<1x16x128xbf16, #tpu.memory_space<vmem>>, %arg3: memref<128x128xbf16, #tpu.memory_space<vmem>>, %arg4: memref<16x128xf32, #tpu.memory_space<vmem>>, %arg5: memref<1x16x128xf32, #tpu.memory_space<vmem>>) attributes {dimension_semantics = [#tpu.dimension_semantics<parallel>, #tpu.dimension_semantics<parallel>], iteration_bounds = array<i64: 2, 2>, scalar_prefetch = 0 : i64, scratch_operands = 0 : i64, tpu.core_type = #tpu.core_type<tc>, window_params = [{transform_indices = @transform_0, window_bounds = array<i64: 1, 16, 128>}, {pipeline_mode = #tpu.pipeline_mode<synchronous>, transform_indices = @transform_1, window_bounds = array<i64: 128, 128>}, {transform_indices = @transform_2, window_bounds = array<i64: 16, 128>}, {transform_indices = @transform_3, window_bounds = array<i64: 1, 16, 128>}]} {
    %c0 = arith.constant 0 : index
    %c0_0 = arith.constant 0 : index
    %c0_1 = arith.constant 0 : index
    %0 = vector.load %arg2[%c0, %c0_0, %c0_1] : memref<1x16x128xbf16, #tpu.memory_space<vmem>>, vector<1x16x128xbf16>
    %1 = vector.shape_cast %0 : vector<1x16x128xbf16> to vector<16x128xbf16>
    %c0_2 = arith.constant 0 : index
    %c0_3 = arith.constant 0 : index
    %2 = vector.load %arg3[%c0_2, %c0_3] : memref<128x128xbf16, #tpu.memory_space<vmem>>, vector<128x128xbf16>
    %cst = arith.constant dense<0.000000e+00> : vector<16x128xf32>
    %3 = tpu.matmul %1, %2, %cst {dimension_numbers = #tpu.dot_dimension_numbers<[1], [0], [0], [1], [0, 0, 1, 1], [], []>} : vector<16x128xbf16>, vector<128x128xbf16>, vector<16x128xf32> -> vector<16x128xf32>
    %c0_4 = arith.constant 0 : index
    %c0_5 = arith.constant 0 : index
    %4 = vector.load %arg4[%c0_4, %c0_5] : memref<16x128xf32, #tpu.memory_space<vmem>>, vector<16x128xf32>
    %5 = arith.addf %3, %4 : vector<16x128xf32>
    %c0_6 = arith.constant 0 : index
    %c0_7 = arith.constant 0 : index
    %c0_8 = arith.constant 0 : index
    %6 = vector.load %arg5[%c0_6, %c0_7, %c0_8] : memref<1x16x128xf32, #tpu.memory_space<vmem>>, vector<1x16x128xf32>
    %7 = vector.shape_cast %6 : vector<1x16x128xf32> to vector<16x128xf32>
    %8 = vector.shape_cast %5 : vector<16x128xf32> to vector<1x16x128xf32>
    tpu.vector_store %arg5[%c0_6, %c0_7, %c0_8], %8 {strides = array<i32>} : memref<1x16x128xf32, #tpu.memory_space<vmem>>, vector<1x16x128xf32>,
    return
  }
  func.func @transform_0(%arg0: i32, %arg1: i32) -> (i32, i32, i32) {
    %c0_i32 = arith.constant 0 : i32
    %c0_i32_0 = arith.constant 0 : i32
    return %arg1, %arg0, %c0_i32 : i32, i32, i32
  }
  func.func @transform_1(%arg0: i32, %arg1: i32) -> (i32, i32) {
    %c0_i32 = arith.constant 0 : i32
    %c0_i32_0 = arith.constant 0 : i32
    %c0_i32_1 = arith.constant 0 : i32
    return %c0_i32, %c0_i32_0 : i32, i32
  }
  func.func @transform_2(%arg0: i32, %arg1: i32) -> (i32, i32) {
    %c0_i32 = arith.constant 0 : i32
    %c0_i32_0 = arith.constant 0 : i32
    return %arg0, %c0_i32 : i32, i32
  }
  func.func @transform_3(%arg0: i32, %arg1: i32) -> (i32, i32, i32) {
    %c0_i32 = arith.constant 0 : i32
    %c0_i32_0 = arith.constant 0 : i32
    return %arg1, %arg0, %c0_i32 : i32, i32, i32
  }
}

</mosaic_0001>

<llo_original>
// kernel: embedding_forward.2
$region0: #{embedding_forward.2}
  #allocation0 [shape = 'u32[]', space=smem, size = 0x4, offset = 0x4, fixed_abs, tag = 'smem constant byte address 0x4 - core index']
  #allocation1 [shape = 'u32[144,128]{1,0:T(1,128)}', space=vmem, size = 0x12000, scoped, tag = 'internal scratch']
  #allocation2 [shape = 'u32[2048]{0}', space=vmem, size = 0x2000, scoped, tag = 'scoped memory for embedding_forward.2']
  #allocation3 [shape = 'u32[2048]{0}', space=vmem, size = 0x2000, scoped, tag = 'scoped memory for embedding_forward.2']
  #allocation4 [shape = 'u32[2048]{0}', space=vmem, size = 0x2000, scoped, tag = 'scoped memory for embedding_forward.2']
  #allocation5 [shape = 'u32[2048]{0}', space=vmem, size = 0x2000, scoped, tag = 'scoped memory for embedding_forward.2']
  #allocation6 [shape = 'u32[2048]{0}', space=vmem, size = 0x2000, scoped, tag = 'scoped memory for embedding_forward.2']
  %s0 = inlined_call_operand.vmem [shape: bf16[128,128], index: 0, kind: input, shape index: {}]
  %s1 = inlined_call_operand.vmem [shape: f32[32,128], index: 1, kind: input, shape index: {}]
  %s2 = inlined_call_operand.vmem [shape: bf16[2,16,48], index: 2, kind: input, shape index: {}]
  %s3 = inlined_call_operand.<no memory space> [shape: bf16[], index: 3, kind: input, shape index: {}]
  %s4 = inlined_call_operand.vmem [shape: f32[2,32,128], index: 4, kind: output, shape index: {}]
  %s5 = sld [smem:[#allocation0]]
  $region45: #{embedding_forward.2} parent=0
    _
  %s7 = ssub.s32 1, %s5
  %s8 = scalar_select 0, %s7, %s5
  %v9 = vstv %s3
  %v10 = vunpack.i.l.bf16 %v9
  %v12 = vunpack.i.h.bf16 %v9
  loop: start=0, step=1, limit=6
  $region2: #{embedding_forward.2} parent=0 // loop_pre_header
    _
  $region3: #{embedding_forward.2} parent=0 // loop_header
    %s15 = sphi 0, %s19
    %p16 = scmp.ge.s32.totalorder %s15, 6
    %s22 = sphi 0, %s34
    %s23 = sphi 0, %s30
    %s24 = sphi 0, %s22
    %s25 = sphi 0, %s23
    %s26 = sphi 0, %s24
    %s27 = sphi 0, %s25
    %s39 = sphi 0, %s41
    %s42 = sphi 0, %s39
    %s43 = sphi 0, %s42
    %s59 = sphi 0, %s43
    %s63 = sphi 0, %s63
    %s65 = sphi 0, %s63
    %s66 = sphi 0, %s65
    %s80 = sphi 0, %s66
    %s86 = sphi 0, %s88
    %s89 = sphi 0, %s86
    %s90 = sphi 0, %s89
    %s106 = sphi 0, %s90
    %s114 = sphi 0, %s116
    %s117 = sphi 0, %s114
    %s118 = sphi 0, %s117
    %s134 = sphi 0, %s118
  $region4: #{embedding_forward.2} parent=0 // loop_header_branch
    %18 = sbr.rel (%p16) target = $region8
  $region5: #{embedding_forward.2} parent=0 // loop_body
    %s20 = ssub.s32 %s15, 1
    %s21 = ssub.s32 %s15, 2
    %s28 = sadd.s32 1, %s23
    %p29 = scmp.ge.s32.totalorder %s28, 2
    %s30 = scalar_select %p29, 0, %s28
    %s31 = sadd.s32 1, %s22
    %s32 = scalar_select %p29, %s31, %s22
    %p33 = scmp.ge.s32.totalorder %s32, 2
    %s34 = scalar_select %p33, 0, %s32
    %s35 = ssub.s32 %s23, %s30
    %s36 = ssub.s32 %s22, %s34
    %s37 = sor.u32 %s35, %s36
    %p38 = scmp.eq.s32.totalorder %s37, 0
    %s40 = sadd.s32 %s39, 1
    %s41 = scalar_select %p38, %s39, %s40
    %p44 = pneg %p38
    %p45 = scmp.eq.s32.totalorder %s15, 3
    %p46 = por %p44, %p45
    %p47 = scmp.ne.s32.totalorder %s39, %s42
    %p48 = scmp.eq.s32.totalorder %s15, 0
    %p49 = por %p47, %p48
    %p50 = scmp.ne.s32.totalorder %s39, %s42
    %p51 = scmp.eq.s32.totalorder %s20, 3
    %p52 = por %p50, %p51
    %p53 = scmp.ne.s32.totalorder %s42, %s43
    %p54 = scmp.eq.s32.totalorder %s20, 0
    %p55 = por %p53, %p54
    %p56 = scmp.ne.s32.totalorder %s42, %s43
    %p57 = scmp.eq.s32.totalorder %s21, 3
    %p58 = por %p56, %p57
    %p60 = scmp.ne.s32.totalorder %s43, %s59
    %p61 = scmp.eq.s32.totalorder %s21, 0
    %p62 = por %p60, %p61
    %s64 = sadd.s32 %s63, 1
    %p67 = scmp.eq.s32.totalorder %s15, 3
    %p68 = scmp.ne.s32.totalorder %s63, %s65
    %p69 = scmp.eq.s32.totalorder %s15, 0
    %p70 = por %p68, %p69
    %p71 = scmp.ne.s32.totalorder %s63, %s65
    %p72 = scmp.eq.s32.totalorder %s20, 3
    %p73 = por %p71, %p72
    %p74 = scmp.ne.s32.totalorder %s65, %s66
    %p75 = scmp.eq.s32.totalorder %s20, 0
    %p76 = por %p74, %p75
    %p77 = scmp.ne.s32.totalorder %s65, %s66
    %p78 = scmp.eq.s32.totalorder %s21, 3
    %p79 = por %p77, %p78
    %p81 = scmp.ne.s32.totalorder %s66, %s80
    %p82 = scmp.eq.s32.totalorder %s21, 0
    %p83 = por %p81, %p82
    %s84 = ssub.s32 %s22, %s34
    %p85 = scmp.eq.s32.totalorder %s84, 0
    %s87 = sadd.s32 %s86, 1
    %s88 = scalar_select %p85, %s86, %s87
    %p91 = pneg %p85
    %p92 = scmp.eq.s32.totalorder %s15, 3
    %p93 = por %p91, %p92
    %p94 = scmp.ne.s32.totalorder %s86, %s89
    %p95 = scmp.eq.s32.totalorder %s15, 0
    %p96 = por %p94, %p95
    %p97 = scmp.ne.s32.totalorder %s86, %s89
    %p98 = scmp.eq.s32.totalorder %s20, 3
    %p99 = por %p97, %p98
    %p100 = scmp.ne.s32.totalorder %s89, %s90
    %p101 = scmp.eq.s32.totalorder %s20, 0
    %p102 = por %p100, %p101
    %p103 = scmp.ne.s32.totalorder %s89, %s90
    %p104 = scmp.eq.s32.totalorder %s21, 3
    %p105 = por %p103, %p104
    %p107 = scmp.ne.s32.totalorder %s90, %s106
    %p108 = scmp.eq.s32.totalorder %s21, 0
    %p109 = por %p107, %p108
    %s110 = ssub.s32 %s23, %s30
    %s111 = ssub.s32 %s22, %s34
    %s112 = sor.u32 %s110, %s111
    %p113 = scmp.eq.s32.totalorder %s112, 0
    %s115 = sadd.s32 %s114, 1
    %s116 = scalar_select %p113, %s114, %s115
    %p119 = pneg %p113
    %p120 = scmp.eq.s32.totalorder %s15, 3
    %p121 = por %p119, %p120
    %p122 = scmp.ne.s32.totalorder %s114, %s117
    %p123 = scmp.eq.s32.totalorder %s15, 0
    %p124 = por %p122, %p123
    %p125 = scmp.ne.s32.totalorder %s114, %s117
    %p126 = scmp.eq.s32.totalorder %s20, 3
    %p127 = por %p125, %p126
    %p128 = scmp.ne.s32.totalorder %s117, %s118
    %p129 = scmp.eq.s32.totalorder %s20, 0
    %p130 = por %p128, %p129
    %p131 = scmp.ne.s32.totalorder %s117, %s118
    %p132 = scmp.eq.s32.totalorder %s21, 3
    %p133 = por %p131, %p132
    %p135 = scmp.ne.s32.totalorder %s118, %s134
    %p136 = scmp.eq.s32.totalorder %s21, 0
    %p137 = por %p135, %p136
    %p138 = scmp.le.s32.totalorder 1, %s15
    %p139 = scmp.lt.s32.totalorder %s15, 5
    %p140 = pnand %p138, %p139
    %p141 = pneg %p140
    // Predicated region
    $region9: #{embedding_forward.2} parent=5 // pred_check
      _
    $region10: #{embedding_forward.2} parent=5 // pred_check_branch
      %143 = sbr.rel (%p140) target = $region12
    $region11: #{embedding_forward.2} parent=5 // pred_region
      %s144 = ssub.s32 %s15, 1
      // Predicated region
      $region13: #{embedding_forward.2} parent=11 // pred_check
        %p145 = pneg %p76
      $region14: #{embedding_forward.2} parent=11 // pred_check_branch
        %147 = sbr.rel (%p145) target = $region16
      $region15: #{embedding_forward.2} parent=11 // pred_region
        _
      $region16: #{embedding_forward.2} parent=11 // pred_fallthru
        _
    $region12: #{embedding_forward.2} parent=5 // pred_fallthru
      _
    %p148 = scmp.lt.s32.totalorder %s15, 4
    // Predicated region
    $region17: #{embedding_forward.2} parent=5 // pred_check
      %p149 = pneg %p148
    $region18: #{embedding_forward.2} parent=5 // pred_check_branch
      %151 = sbr.rel (%p149) target = $region20
    $region19: #{embedding_forward.2} parent=5 // pred_region
      // Predicated region
      $region21: #{embedding_forward.2} parent=19 // pred_check
        %p152 = pneg %p49
      $region22: #{embedding_forward.2} parent=19 // pred_check_branch
        %154 = sbr.rel (%p152) target = $region24
      $region23: #{embedding_forward.2} parent=19 // pred_region
        %s155 = smul.u32 2, %s22
        %s156 = ssub.s32 1, %s155
        %p157 = scmp.gt.s32.totalorder %s156, 0
        %s158 = scalar_select %p157, %s156, 0
        %s159 = ssub.s32 3, %s155
        %s160 = ssub.s32 %s159, %s158
        %s161 = smul.u32 64, %s160
        %p162 = scmp.lt.s32.totalorder %s23, 1
        %s163 = scalar_select %p162, %s23, 1
        %s164 = ssub.s32 %s155, 1
        %p165 = scmp.lt.s32.totalorder %s164, 1
        %s166 = scalar_select %p165, %s164, 1
        %s167 = smul.addr %s163, 2
        %s168 = sadd.s32 %s166, %s167
        %s169 = smul.addr %s168, 4
        %s170 = scalar_lea.vmem %s2, %s169
        %s171 = smul.u32 2, %s22
        %s172 = ssub.s32 1, %s171
        %p173 = scmp.gt.s32.totalorder %s172, 0
        %s174 = scalar_select %p173, %s172, 0
        %s175 = ssub.s32 3, %s171
        %s176 = ssub.s32 %s175, %s174
        %s177 = smul.u32 64, %s176
      $region24: #{embedding_forward.2} parent=19 // pred_fallthru
        _
      // Predicated region
      $region25: #{embedding_forward.2} parent=19 // pred_check
        %p178 = pneg %p96
      $region26: #{embedding_forward.2} parent=19 // pred_check_branch
        %180 = sbr.rel (%p178) target = $region28
      $region27: #{embedding_forward.2} parent=19 // pred_region
        %s181 = smul.u32 2, %s22
        %p182 = scmp.lt.s32.totalorder %s181, 3
        %s183 = scalar_select %p182, %s181, 3
        %s184 = smul.addr %s183, 8
        %s185 = scalar_lea.vmem %s1, %s184
        %s186 = smul.u32 2, %s22
      $region28: #{embedding_forward.2} parent=19 // pred_fallthru
        _
    $region20: #{embedding_forward.2} parent=5 // pred_fallthru
      _
    %p187 = scmp.le.s32.totalorder 1, %s15
    %p188 = scmp.lt.s32.totalorder %s15, 5
    %p189 = pnand %p187, %p188
    %p190 = pneg %p189
    // Predicated region
    $region29: #{embedding_forward.2} parent=5 // pred_check
      _
    $region30: #{embedding_forward.2} parent=5 // pred_check_branch
      %192 = sbr.rel (%p189) target = $region32
    $region31: #{embedding_forward.2} parent=5 // pred_region
      #allocation7 [shape = 'u8[4096]{0}', space=vmem, size = 0x1000, dematerialized = true, scoped, tag = 'FusionAdapter Buffer %fusion.1 = bf16[2,32,128]{2,1,0:T(8,128)(2,1)} fusion(%param_2.4, %param_3.3), kind=kLoop, calls=%fused_computation.4.clone, metadata={op_name="jit(embedding_forward)/jit(_pad)/pad" stack_frame_id=9}']
      %s193 = ssub.s32 %s15, 1
      %s194 = smul.u32 2, %s24
      %s195 = ssub.s32 1, %s194
      %p196 = scmp.gt.s32.totalorder %s195, 0
      %s197 = scalar_select %p196, %s195, 0
      %s198 = ssub.s32 3, %s194
      %s199 = ssub.s32 %s198, %s197
      %s200 = smul.u32 64, %s199
      %p201 = scmp.lt.s32.totalorder %s25, 1
      %s202 = scalar_select %p201, %s25, 1
      %s203 = ssub.s32 %s194, 1
      %p204 = scmp.lt.s32.totalorder %s203, 1
      %s205 = scalar_select %p204, %s203, 1
      %s206 = smul.addr %s202, 2
      %s207 = sadd.s32 %s205, %s206
      %s208 = smul.addr %s207, 4
      %s209 = scalar_lea.vmem %s2, %s208
      %p210 = pneg %p55
      %p211 = pneg %p52
      %p212 = pneg %p76
      %p213 = pneg %p73
      %s214 = smul.u32 2, %s24
      %p215 = scmp.lt.s32.totalorder %s214, 3
      %s216 = scalar_select %p215, %s214, 3
      %s217 = smul.addr %s216, 8
      %s218 = scalar_lea.vmem %s1, %s217
      %p219 = pneg %p102
      %p220 = pneg %p99
      %p221 = pneg %p130
      %p222 = pneg %p127
      %s223 = smul.u32 2, %s24
      %p224 = scmp.lt.s32.totalorder %s25, 1
      %s225 = scalar_select %p224, %s25, 1
      %p226 = scmp.lt.s32.totalorder %s223, 3
      %s227 = scalar_select %p226, %s223, 3
      %s228 = smul.addr %s225, 4
      %s229 = sadd.s32 %s227, %s228
      %s230 = smul.addr %s229, 8
      %s231 = scalar_lea.vmem %s4, %s230
      %s232 = smul.u32 2, %s24
      %s233 = ssub.s32 1, %s232
      %p234 = scmp.gt.s32.totalorder %s233, 0
      %s235 = scalar_select %p234, %s233, 0
      %s236 = ssub.s32 3, %s232
      %s237 = ssub.s32 %s236, %s235
      %s238 = smul.u32 64, %s237
      %p239 = scmp.lt.s32.totalorder %s25, 1
      %s240 = scalar_select %p239, %s25, 1
      %s241 = ssub.s32 %s232, 1
      %p242 = scmp.lt.s32.totalorder %s241, 1
      %s243 = scalar_select %p242, %s241, 1
      %s244 = smul.addr %s240, 2
      %s245 = sadd.s32 %s243, %s244
      %s246 = smul.addr %s245, 4
      %s247 = scalar_lea.vmem %s2, %s246
      %s248 = smul.u32 2, %s24
      %s249 = ssub.s32 1, %s248
      %p250 = scmp.gt.s32.totalorder %s249, 0
      %s251 = scalar_select %p250, %s249, 0
      %s252 = ssub.s32 3, %s248
      %s253 = ssub.s32 %s252, %s251
      %s254 = smul.u32 64, %s253
      %s255 = smul.u32 2, %s24
      %p256 = scmp.lt.s32.totalorder %s255, 3
      %s257 = scalar_select %p256, %s255, 3
      %s258 = smul.addr %s257, 8
      %s259 = scalar_lea.vmem %s1, %s258
      %s260 = smul.u32 2, %s24
      %s261 = smul.u32 2, %s24
      %p262 = scmp.lt.s32.totalorder %s25, 1
      %s263 = scalar_select %p262, %s25, 1
      %p264 = scmp.lt.s32.totalorder %s261, 3
      %s265 = scalar_select %p264, %s261, 3
      %s266 = smul.addr %s263, 4
      %s267 = sadd.s32 %s265, %s266
      %s268 = smul.addr %s267, 8
      %s269 = scalar_lea.vmem %s4, %s268
      %s270 = smul.u32 2, %s24
      %s271 = ssub.s32 %s248, 1
      %s272 = ssub.s32 2, %s248
      %s273 = sor.u32 %s271, %s272
      %p274 = scmp.lt.s32.totalorder %s273, 0
      %s275 = scalar_select %p274, 0, 255
      %s276 = sshrl.u32 %s275, 1
      %s277 = sor.u32 %s275, %s276
      %s278 = sand.u32 %s277, 85
      %s279 = sshrl.u32 %s278, 1
      %s280 = sor.u32 %s278, %s279
      %s281 = sand.u32 51, %s280
      %s282 = sshrl.u32 %s281, 2
      %s283 = sor.u32 %s281, %s282
      %s284 = sand.u32 15, %s283
      %v285 = vld [vmem:[%s247] sm:%s284]
      %v286 = vunpack.c.l.bf16 %v285
      %v287 = vunpack.c.h.bf16 %v285
      %s288 = ssub.s32 %s248, 1
      %s289 = ssub.s32 2, %s248
      %s290 = sor.u32 %s288, %s289
      %v291 = vstv %s290
      %vm292 = vcmp.lt.s32.totalorder %v291, 0
      %v293 = vsel %vm292, %v10, %v286
      %v294 = vlaneseq
      %v295 = vand.u32 %v294, 127
      %vm297 = vcmp.lt.s32.totalorder %v295, 48
      %v298 = vsel %vm297, %v293, %v10
      %s299 = scalar_lea.vmem %s247, 4
      %s300 = sadd.s32 %s248, 1
      %s301 = ssub.s32 %s300, 1
      %s302 = ssub.s32 2, %s300
      %s303 = sor.u32 %s301, %s302
      %p304 = scmp.lt.s32.totalorder %s303, 0
      %s305 = scalar_select %p304, 0, 255
      %s306 = sshrl.u32 %s305, 1
      %s307 = sor.u32 %s305, %s306
      %s308 = sand.u32 %s307, 85
      %s309 = sshrl.u32 %s308, 1
      %s310 = sor.u32 %s308, %s309
      %s311 = sand.u32 51, %s310
      %s312 = sshrl.u32 %s311, 2
      %s313 = sor.u32 %s311, %s312
      %s314 = sand.u32 15, %s313
      %v315 = vld [vmem:[%s299] sm:%s314]
      %v316 = vunpack.c.l.bf16 %v315
      %v317 = vunpack.c.h.bf16 %v315
      %s318 = sadd.s32 %s248, 1
      %s319 = ssub.s32 %s318, 1
      %s320 = ssub.s32 2, %s318
      %s321 = sor.u32 %s319, %s320
      %v322 = vstv %s321
      %vm323 = vcmp.lt.s32.totalorder %v322, 0
      %v324 = vsel %vm323, %v10, %v316
      %v325 = vlaneseq
      %v326 = vand.u32 %v325, 127
      %vm328 = vcmp.lt.s32.totalorder %v326, 48
      %v329 = vsel %vm328, %v324, %v10
      %vm330 = vcmask 1046528
      %v331 = vsel %vm330, %v329, %v298
      %v332 = vrot.slane %v331, 7
      %v333 = vpack.c.bf16 0.0, %v332
      %335 = vst [vmem:[#allocation7] sm:$0xf] %v333
      %s336 = scalar_lea.vmem %s247, 8
      %s337 = sadd.s32 %s248, 2
      %s338 = ssub.s32 %s337, 1
      %s339 = ssub.s32 2, %s337
      %s340 = sor.u32 %s338, %s339
      %p341 = scmp.lt.s32.totalorder %s340, 0
      %s342 = scalar_select %p341, 0, 255
      %s343 = sshrl.u32 %s342, 1
      %s344 = sor.u32 %s342, %s343
      %s345 = sand.u32 %s344, 85
      %s346 = sshrl.u32 %s345, 1
      %s347 = sor.u32 %s345, %s346
      %s348 = sand.u32 51, %s347
      %s349 = sshrl.u32 %s348, 2
      %s350 = sor.u32 %s348, %s349
      %s351 = sand.u32 15, %s350
      %v352 = vld [vmem:[%s336] sm:%s351]
      %v353 = vunpack.c.l.bf16 %v352
      %v354 = vunpack.c.h.bf16 %v352
      %s355 = sadd.s32 %s248, 2
      %s356 = ssub.s32 %s355, 1
      %s357 = ssub.s32 2, %s355
      %s358 = sor.u32 %s356, %s357
      %v359 = vstv %s358
      %vm360 = vcmp.lt.s32.totalorder %v359, 0
      %v361 = vsel %vm360, %v10, %v353
      %v362 = vlaneseq
      %v363 = vand.u32 %v362, 127
      %vm365 = vcmp.lt.s32.totalorder %v363, 48
      %v366 = vsel %vm365, %v361, %v10
      %vm367 = vcmask 1046528
      %v368 = vsel %vm367, %v366, %v329
      %v369 = vrot.slane %v368, 7
      %s370 = scalar_lea.vmem [#allocation7], 4
      %v371 = vpack.c.bf16 0.0, %v369
      %373 = vst [vmem:[%s370] sm:$0xf] %v371
      %v375 = vld [vmem:[#allocation7] sm:$0xf]
      %v376 = vld [vmem:[#allocation7 + $0x4] sm:$0xf]
      %v377 = vld [vmem:[%s0] sm:$0xf]
      %v378 = vld [vmem:[%s0 + $0x4] sm:$0xf]
      %v379 = vld [vmem:[%s0 + $0x8] sm:$0xf]
      %v380 = vld [vmem:[%s0 + $0xc] sm:$0xf]
      %v381 = vld [vmem:[%s0 + $0x10] sm:$0xf]
      %v382 = vld [vmem:[%s0 + $0x14] sm:$0xf]
      %v383 = vld [vmem:[%s0 + $0x18] sm:$0xf]
      %v384 = vld [vmem:[%s0 + $0x1c] sm:$0xf]
      %v385 = vld [vmem:[%s0 + $0x20] sm:$0xf]
      %v386 = vld [vmem:[%s0 + $0x24] sm:$0xf]
      %v387 = vld [vmem:[%s0 + $0x28] sm:$0xf]
      %v388 = vld [vmem:[%s0 + $0x2c] sm:$0xf]
      %v389 = vld [vmem:[%s0 + $0x30] sm:$0xf]
      %v390 = vld [vmem:[%s0 + $0x34] sm:$0xf]
      %v391 = vld [vmem:[%s0 + $0x38] sm:$0xf]
      %v392 = vld [vmem:[%s0 + $0x3c] sm:$0xf]
      %v393 = vld [vmem:[%s259] sm:$0xff]
      %v394 = vld [vmem:[%s259 + $0x8] sm:$0xff]
      %v397 = vunpack.c.l.b16 %v375
      %v398 = vunpack.c.l.b16 %v376
      %v399 = vpack.c.b16 %v398, %v397
      %v417 = vunpack.c.l.b16 %v377
      %v418 = vunpack.c.l.b16 %v378
      %v419 = vunpack.c.l.b16 %v379
      %v420 = vunpack.c.l.b16 %v380
      %v421 = vunpack.c.l.b16 %v381
      %v422 = vunpack.c.l.b16 %v382
      %v423 = vunpack.c.l.b16 %v383
      %v424 = vunpack.c.l.b16 %v384
      %v425 = vunpack.c.l.b16 %v385
      %v426 = vunpack.c.l.b16 %v386
      %v427 = vunpack.c.l.b16 %v387
      %v428 = vunpack.c.l.b16 %v388
      %v429 = vunpack.c.l.b16 %v389
      %v430 = vunpack.c.l.b16 %v390
      %v431 = vunpack.c.l.b16 %v391
      %v432 = vunpack.c.l.b16 %v392
      %v433 = vpack.c.b16 %v418, %v417
      %v434 = vpack.c.b16 %v420, %v419
      %v435 = vpack.c.b16 %v422, %v421
      %v436 = vpack.c.b16 %v424, %v423
      %v437 = vpack.c.b16 %v426, %v425
      %v438 = vpack.c.b16 %v428, %v427
      %v439 = vpack.c.b16 %v430, %v429
      %v440 = vpack.c.b16 %v432, %v431
      %449 = vmatprep.subr.bf16.mxu0 0
      %450 = vmatpush1.bf16.msra.mxu0 %v433
      %451 = vmatprep.subr.bf16.mxu0 0
      %452 = vmatpush1.bf16.msra.mxu0 %v434
      %453 = vmatprep.subr.bf16.mxu0 0
      %454 = vmatpush1.bf16.msra.mxu0 %v435
      %455 = vmatprep.subr.bf16.mxu0 0
      %456 = vmatpush1.bf16.msra.mxu0 %v436
      %457 = vmatprep.subr.bf16.mxu0 0
      %458 = vmatpush1.bf16.msra.mxu0 %v437
      %459 = vmatprep.subr.bf16.mxu0 0
      %460 = vmatpush1.bf16.msra.mxu0 %v438
      %461 = vmatprep.subr.bf16.mxu0 0
      %462 = vmatpush1.bf16.msra.mxu0 %v439
      %463 = vmatprep.subr.bf16.mxu0 0
      %464 = vmatpush1.bf16.msra.mxu0 %v440
      %465 = vmatprep.subr.bf16.mxu0 0
      %466 = vmatpush1.bf16.msra.mxu0 0
      %467 = vmatprep.subr.bf16.mxu0 0
      %468 = vmatpush1.bf16.msra.mxu0 0
      %469 = vmatprep.subr.bf16.mxu0 0
      %470 = vmatpush1.bf16.msra.mxu0 0
      %471 = vmatprep.subr.bf16.mxu0 0
      %472 = vmatpush1.bf16.msra.mxu0 0
      %473 = vmatprep.subr.bf16.mxu0 0
      %474 = vmatpush1.bf16.msra.mxu0 0
      %475 = vmatprep.subr.bf16.mxu0 0
      %476 = vmatpush1.bf16.msra.mxu0 0
      %477 = vmatprep.subr.bf16.mxu0 0
      %478 = vmatpush1.bf16.msra.mxu0 0
      %479 = vmatprep.subr.bf16.mxu0 0
      %480 = vmatpush1.bf16.msra.mxu0 0
      %481 = vmatprep.mubr.bf16.mxu0 0
      %482 = vmatmul.mubr.bf16.gmra.mrb[0].mxu0 %v399
      %v483 = vpop.f32.mrb[0].mxu0
      %v484 = vadd.f32 %v393, %v483
      %v485 = vpop.f32.mrb[0].mxu0
      %v486 = vpop.f32.mrb[0].mxu0
      %v487 = vadd.f32 %v394, %v486
      %v488 = vpop.f32.mrb[0].mxu0
      %489 = vdwg.mxu0
      %490 = vst [vmem:[%s269] sm:$0xff] %v484
      %491 = vst [vmem:[%s269 + $0x8] sm:$0xff] %v487
      %s492 = smul.u32 2, %s24
      %p493 = scmp.lt.s32.totalorder %s25, 1
      %s494 = scalar_select %p493, %s25, 1
      %p495 = scmp.lt.s32.totalorder %s492, 3
      %s496 = scalar_select %p495, %s492, 3
      %s497 = smul.addr %s494, 4
      %s498 = sadd.s32 %s496, %s497
      %s499 = smul.addr %s498, 8
      %s500 = scalar_lea.vmem %s4, %s499
      // Predicated region
      $region33: #{embedding_forward.2} parent=31 // pred_check
        %p501 = pneg %p127
      $region34: #{embedding_forward.2} parent=31 // pred_check_branch
        %503 = sbr.rel (%p501) target = $region36
      $region35: #{embedding_forward.2} parent=31 // pred_region
        %s504 = smul.u32 2, %s24
      $region36: #{embedding_forward.2} parent=31 // pred_fallthru
        _
    $region32: #{embedding_forward.2} parent=5 // pred_fallthru
      _
    %p505 = scmp.le.s32.totalorder 2, %s15
    // Predicated region
    $region37: #{embedding_forward.2} parent=5 // pred_check
      %p506 = pneg %p505
    $region38: #{embedding_forward.2} parent=5 // pred_check_branch
      %508 = sbr.rel (%p506) target = $region40
    $region39: #{embedding_forward.2} parent=5 // pred_region
      %s509 = ssub.s32 %s15, 2
      // Predicated region
      $region41: #{embedding_forward.2} parent=39 // pred_check
        %p510 = pneg %p133
      $region42: #{embedding_forward.2} parent=39 // pred_check_branch
        %512 = sbr.rel (%p510) target = $region44
      $region43: #{embedding_forward.2} parent=39 // pred_region
        %s513 = smul.u32 2, %s26
        %p514 = scmp.lt.s32.totalorder %s27, 1
        %s515 = scalar_select %p514, %s27, 1
        %p516 = scmp.lt.s32.totalorder %s513, 3
        %s517 = scalar_select %p516, %s513, 3
        %s518 = smul.addr %s515, 4
        %s519 = sadd.s32 %s517, %s518
        %s520 = smul.addr %s519, 8
        %s521 = scalar_lea.vmem %s4, %s520
      $region44: #{embedding_forward.2} parent=39 // pred_fallthru
        _
    $region40: #{embedding_forward.2} parent=5 // pred_fallthru
      _
  $region6: #{embedding_forward.2} parent=0 // loop_footer
    %s19 = sadd.s32 1, %s15
  $region7: #{embedding_forward.2} parent=0 // loop_footer_branch
    %14 = sbr.rel target = $region3
  $region8: #{embedding_forward.2} parent=0 // loop_exit
    _

</llo_original>
